<compile_context>
chip_gen: v5e
topology: v5e:2x2
jax: 0.10.0
libtpu: 0.0.40
codegen_flags: <defaults>
</compile_context>

<pallas_src>
import functools

import jax
import jax.numpy as jnp
from jax.experimental import pallas as pl
from jax.experimental.pallas import tpu as pltpu


def _convt1x1_clamp_kernel(x_ref, w_ref, b_ref, o_ref, *, n, c_in, c_out,
                           min_value, max_value):
    # x_ref: (N*C_in, HW)    VMEM, float32
    # w_ref: (C_out, C_in)   VMEM, float32
    # b_ref: (C_out, 1)      VMEM, float32
    # o_ref: (N*C_out, HW)   VMEM, float32
    w = w_ref[...]            # (C_out, C_in), tiny, stays in vregs
    bias = b_ref[...]         # (C_out, 1)
    for b in range(n):
        xb = x_ref[pl.ds(b * c_in, c_in), :]            # (C_in, HW)
        # (C_out, 1) * (1, HW) -> (C_out, HW): sublane-dense VPU FMAs,
        # unrolled over the C_in=3 contraction.
        acc = w[:, 0:1] * xb[0:1, :]
        for c in range(1, c_in):
            acc = acc + w[:, c:c + 1] * xb[c:c + 1, :]
        # Epilogue once on the whole (C_out, HW) block.
        acc = acc + bias
        acc = jnp.maximum(acc, min_value)   # torch.maximum(v1, 0.0)
        acc = jnp.minimum(acc, max_value)   # torch.clamp_max(v2, -0.05)
        # Single unmasked (C_out, HW) store per batch.
        o_ref[pl.ds(b * c_out, c_out), :] = acc.astype(o_ref.dtype)


def model_forward(x, weight, bias, *, min_value=0.0, max_value=-0.05):
    """x: (N, C_in, H, W) f32, weight: (C_in, C_out, 1, 1) f32, bias: (C_out,) f32."""
    N, C_in, H, W = x.shape
    C_out = weight.shape[1]
    assert H > 2 and W > 2, "padding=1 crop needs H, W > 2"
    HW = H * W

    # Pure views for the activations (no transposes, no crop copies before the
    # kernel). Weight is a tiny (3, 8) array; transposing it to (C_out, C_in)
    # so its columns lane-broadcast cleanly costs nothing.
    x2d = x.reshape(N * C_in, HW)
    w2d = weight.reshape(C_in, C_out).T          # (C_out, C_in)
    b2d = bias.reshape(C_out, 1)                 # (C_out, 1)

    kernel = functools.partial(
        _convt1x1_clamp_kernel, n=N, c_in=C_in, c_out=C_out,
        min_value=float(min_value), max_value=float(max_value))

    out2d = pl.pallas_call(
        kernel,
        out_shape=jax.ShapeDtypeStruct((N * C_out, HW), jnp.float32),
        in_specs=[
            pl.BlockSpec(memory_space=pltpu.MemorySpace.VMEM),  # activations
            pl.BlockSpec(memory_space=pltpu.MemorySpace.VMEM),  # weight tile
            pl.BlockSpec(memory_space=pltpu.MemorySpace.VMEM),  # bias tile
        ],
        out_specs=pl.BlockSpec(memory_space=pltpu.MemorySpace.VMEM),
    )(x2d, w2d, b2d)

    # Pure view back to NCHW, then apply the padding=1 crop on the small
    # output (kept outside the kernel so kernel stores stay lane-dense).
    out = out2d.reshape(N, C_out, H, W)
    return out[:, :, 1:H - 1, 1:W - 1]


if __name__ == "__main__":
    key = jax.random.PRNGKey(0)
    k_x, k_w, k_b = jax.random.split(key, 3)

    # Small shapes consistent with the module: N=1, C_in=3 -> C_out=8, spatial=16.
    N, C_in, C_out, H, W = 1, 3, 8, 16, 16
    x = jax.random.normal(k_x, (N, C_in, H, W), dtype=jnp.float32)

    # Deterministic params (ConvTranspose2d weight shape: (C_in, C_out, 1, 1)).
    fan = C_in * 1 * 1
    bound = 1.0 / (fan ** 0.5)
    weight = jax.random.uniform(
        k_w, (C_in, C_out, 1, 1), dtype=jnp.float32, minval=-bound, maxval=bound)
    bias = jax.random.uniform(
        k_b, (C_out,), dtype=jnp.float32, minval=-bound, maxval=bound)

    out = model_forward(x, weight, bias, min_value=0.0, max_value=-0.05)
    out = jax.block_until_ready(out)

    # Pure-JAX reference of the same math.
    ref = jnp.einsum("nchw,co->nohw", x, weight.reshape(C_in, C_out))
    ref = ref + bias.reshape(1, C_out, 1, 1)
    ref = jnp.minimum(jnp.maximum(ref, 0.0), -0.05)
    ref = ref[:, :, 1:H - 1, 1:W - 1]

    assert out.shape == (N, C_out, H - 2, W - 2), out.shape
    assert jnp.allclose(out, ref, atol=1e-5), "mismatch vs reference"

    print("KERNEL_OK")
</pallas_src>

<mosaic_0001>
module attributes {stable_mosaic.version = 11 : i64} {
  func.func @_convt1x1_clamp_kernel(%arg0: memref<3x256xf32, #tpu.memory_space<vmem>>, %arg1: memref<8x3xf32, #tpu.memory_space<vmem>>, %arg2: memref<8x1xf32, #tpu.memory_space<vmem>>, %arg3: memref<8x256xf32, #tpu.memory_space<vmem>>) attributes {dimension_semantics = [], scalar_prefetch = 0 : i64, scratch_operands = 0 : i64, tpu.core_type = #tpu.core_type<tc>} {
    %c0 = arith.constant 0 : index
    %c0_0 = arith.constant 0 : index
    %0 = vector.load %arg1[%c0, %c0_0] : memref<8x3xf32, #tpu.memory_space<vmem>>, vector<8x3xf32>
    %c0_1 = arith.constant 0 : index
    %c0_2 = arith.constant 0 : index
    %1 = vector.load %arg2[%c0_1, %c0_2] : memref<8x1xf32, #tpu.memory_space<vmem>>, vector<8x1xf32>
    %c0_3 = arith.constant 0 : index
    %c0_4 = arith.constant 0 : index
    %2 = vector.load %arg0[%c0_3, %c0_4] : memref<3x256xf32, #tpu.memory_space<vmem>>, vector<3x256xf32>
    %3 = vector.extract_strided_slice %0 {offsets = [0, 0], sizes = [8, 1], strides = [1, 1]} : vector<8x3xf32> to vector<8x1xf32>
    %4 = vector.extract_strided_slice %2 {offsets = [0, 0], sizes = [1, 256], strides = [1, 1]} : vector<3x256xf32> to vector<1x256xf32>
    %5 = vector.broadcast %3 : vector<8x1xf32> to vector<8x256xf32>
    %6 = vector.broadcast %4 : vector<1x256xf32> to vector<8x256xf32>
    %7 = arith.mulf %5, %6 : vector<8x256xf32>
    %8 = vector.extract_strided_slice %0 {offsets = [0, 1], sizes = [8, 1], strides = [1, 1]} : vector<8x3xf32> to vector<8x1xf32>
    %9 = vector.extract_strided_slice %2 {offsets = [1, 0], sizes = [1, 256], strides = [1, 1]} : vector<3x256xf32> to vector<1x256xf32>
    %10 = vector.broadcast %8 : vector<8x1xf32> to vector<8x256xf32>
    %11 = vector.broadcast %9 : vector<1x256xf32> to vector<8x256xf32>
    %12 = arith.mulf %10, %11 : vector<8x256xf32>
    %13 = arith.addf %7, %12 : vector<8x256xf32>
    %14 = vector.extract_strided_slice %0 {offsets = [0, 2], sizes = [8, 1], strides = [1, 1]} : vector<8x3xf32> to vector<8x1xf32>
    %15 = vector.extract_strided_slice %2 {offsets = [2, 0], sizes = [1, 256], strides = [1, 1]} : vector<3x256xf32> to vector<1x256xf32>
    %16 = vector.broadcast %14 : vector<8x1xf32> to vector<8x256xf32>
    %17 = vector.broadcast %15 : vector<1x256xf32> to vector<8x256xf32>
    %18 = arith.mulf %16, %17 : vector<8x256xf32>
    %19 = arith.addf %13, %18 : vector<8x256xf32>
    %20 = vector.broadcast %1 : vector<8x1xf32> to vector<8x256xf32>
    %21 = arith.addf %19, %20 : vector<8x256xf32>
    %cst = arith.constant 0.000000e+00 : f32
    %22 = vector.broadcast %cst : f32 to vector<8x256xf32>
    %23 = arith.maximumf %21, %22 : vector<8x256xf32>
    %cst_5 = arith.constant -5.000000e-02 : f32
    %24 = vector.broadcast %cst_5 : f32 to vector<8x256xf32>
    %25 = arith.minimumf %23, %24 : vector<8x256xf32>
    %c0_6 = arith.constant 0 : index
    %c0_7 = arith.constant 0 : index
    %26 = vector.load %arg3[%c0_6, %c0_7] : memref<8x256xf32, #tpu.memory_space<vmem>>, vector<8x256xf32>
    tpu.vector_store %arg3[%c0_6, %c0_7], %25 {strides = array<i32>} : memref<8x256xf32, #tpu.memory_space<vmem>>, vector<8x256xf32>,
    return
  }
}

</mosaic_0001>

<llo_original>
// kernel: tpu_custom_call.1
$region0: #{tpu_custom_call.1}
  #allocation0 [shape = 'u32[]', space=smem, size = 0x4, offset = 0x4, fixed_abs, tag = 'smem constant byte address 0x4 - core index']
  #allocation1 [shape = 'u32[72,128]{1,0:T(1,128)}', space=vmem, size = 0x9000, scoped, tag = 'internal scratch']
  %s0 = inlined_call_operand.vmem [shape: f32[3,256], index: 0, kind: input, shape index: {}]
  %s1 = inlined_call_operand.vmem [shape: f32[8,3], index: 1, kind: input, shape index: {}]
  %s2 = inlined_call_operand.vmem [shape: f32[8,1], index: 2, kind: input, shape index: {}]
  %s3 = inlined_call_operand.hbm [shape: f32[8,256], index: 3, kind: output, shape index: {}]
  %s4 = sld [smem:[#allocation0]]
  $region22: #{tpu_custom_call.1} parent=0
    _
  %s6 = ssub.s32 1, %s4
  %s7 = scalar_select 0, %s6, %s4
  $region1: #{tpu_custom_call.1} parent=0
    #allocation2 [shape = 'u8[8192]{0}', space=vmem, size = 0x2000, scoped, tag = 'output window, operand 0, single buffered']
    #allocation3 [shape = 's32[1]{0}', space=sflag, size = 0x4, scoped, tag = 'scoped memory for tpu_custom_call.1']
    %8 = vsyncpa [#allocation3], 0
    // Predicated region
    $region2: #{tpu_custom_call.1} parent=1 // pred_check
      _
    $region3: #{tpu_custom_call.1} parent=1 // pred_check_branch
      %10 = sbr.rel (0) target = $region5
    $region4: #{tpu_custom_call.1} parent=1 // pred_region
      _
    $region5: #{tpu_custom_call.1} parent=1 // pred_fallthru
      _
    // Predicated region
    $region6: #{tpu_custom_call.1} parent=1 // pred_check
      _
    $region7: #{tpu_custom_call.1} parent=1 // pred_check_branch
      %12 = sbr.rel (0) target = $region9
    $region8: #{tpu_custom_call.1} parent=1 // pred_region
      _
    $region9: #{tpu_custom_call.1} parent=1 // pred_fallthru
      _
    // Predicated region
    $region10: #{tpu_custom_call.1} parent=1 // pred_check
      _
    $region11: #{tpu_custom_call.1} parent=1 // pred_check_branch
      %14 = sbr.rel (0) target = $region13
    $region12: #{tpu_custom_call.1} parent=1 // pred_region
      _
    $region13: #{tpu_custom_call.1} parent=1 // pred_fallthru
      _
    %v15 = vld [vmem:[%s1] sm:$0xff]
    %v16 = vld [vmem:[%s2] sm:$0xff]
    %v17 = vld [vmem:[%s0] sm:$0x77]
    %19 = vset.pattern.permute.xlu0 0
    %20 = vperm.xlu0 %19, %v15
    %v21 = vpop.permute.xlu0 %20
    %v24 = vperm.slane %v17, 0
    %v25 = vperm.slane %v17, 4
    %v28 = vperm.slane %v24, 0
    %v29 = vperm.slane %v25, 0
    %v30 = vmul.f32 %v21, %v28
    %v31 = vmul.f32 %v21, %v29
    %32 = vset.pattern.permute.xlu0 1
    %33 = vperm.xlu0 %32, %v15
    %v34 = vpop.permute.xlu0 %33
    %v36 = vperm.slane %v17, 1
    %v37 = vperm.slane %v17, 5
    %v40 = vperm.slane %v36, 1
    %v41 = vperm.slane %v37, 1
    %v42 = vmul.f32 %v34, %v40
    %v43 = vmul.f32 %v34, %v41
    %v44 = vadd.f32 %v30, %v42
    %v45 = vadd.f32 %v31, %v43
    %46 = vset.pattern.permute.xlu0 2
    %47 = vperm.xlu0 %46, %v15
    %v48 = vpop.permute.xlu0 %47
    %v50 = vperm.slane %v17, 2
    %v51 = vperm.slane %v17, 6
    %v54 = vperm.slane %v50, 2
    %v55 = vperm.slane %v51, 2
    %v56 = vmul.f32 %v48, %v54
    %v57 = vmul.f32 %v48, %v55
    %v58 = vadd.f32 %v44, %v56
    %v59 = vadd.f32 %v45, %v57
    %61 = vset.pattern.permute.xlu0 0
    %62 = vperm.xlu0 %61, %v16
    %v63 = vpop.permute.xlu0 %62
    %v65 = vadd.f32 %v58, %v63
    %v66 = vadd.f32 %v59, %v63
    %v67 = vmax.f32 %v65, 0.0
    %v68 = vmax.f32 %v66, 0.0
    %v69 = vmin.f32 %v67, -0.05
    %v70 = vmin.f32 %v68, -0.05
    %71 = vst [vmem:[#allocation2] sm:$0xff] %v69
    %72 = vst [vmem:[#allocation2 + $0x8] sm:$0xff] %v70
    // Predicated region
    $region14: #{tpu_custom_call.1} parent=1 // pred_check
      _
    $region15: #{tpu_custom_call.1} parent=1 // pred_check_branch
      %74 = sbr.rel (0) target = $region17
    $region16: #{tpu_custom_call.1} parent=1 // pred_region
      %76 = vsyncadd [#allocation3], 0
      %s78 = sshll.u32 [#allocation2], 4
      %s79 = int_to_ptr.vmem [resolvable:$true] %s78
      %s80 = sshll.u32 %s3, 4
      %s81 = int_to_ptr.hbm [resolvable:$true] %s80
      %83 = dma.vmem_to_hbm [thread:$0]  %s79, 256, %s81, [#allocation3]
    $region17: #{tpu_custom_call.1} parent=1 // pred_fallthru
      _
    // Predicated region
    $region18: #{tpu_custom_call.1} parent=1 // pred_check
      _
    $region19: #{tpu_custom_call.1} parent=1 // pred_check_branch
      %85 = sbr.rel (0) target = $region21
    $region20: #{tpu_custom_call.1} parent=1 // pred_region
      %87 = dma.done [#allocation3], 256
    $region21: #{tpu_custom_call.1} parent=1 // pred_fallthru
      _
    %88 = vsyncpa [#allocation3], 1

</llo_original>
